<compile_context>
chip_gen: v5e
topology: v5e:2x2
jax: 0.10.0
libtpu: 0.0.40
codegen_flags: <defaults>
</compile_context>

<pallas_src>
import functools

import jax
import jax.numpy as jnp
from jax.experimental import pallas as pl
from jax.experimental.pallas import tpu as pltpu

EPS = 1e-5          # InstanceNorm3d default eps
NEG_SLOPE = 0.01    # LeakyReLU default negative_slope


def _conv_stats_kernel(patches_ref, w_ref, y_ref, mean_ref, rstd_ref,
                       sum_ref, sq_ref, *, inv_p):
    # patches_ref: (1, K, tP)  bf16   one P-tile of one sample's 2x2x2 patches
    # w_ref:       (Cout, K)   bf16   conv weight (resident; index_map const)
    # y_ref:       (1, Cout, tP) f32  unnormalized conv output tile
    # mean_ref, rstd_ref: (1, Cout, 1) f32  per-sample stats (written at last tile)
    # sum_ref, sq_ref:    (Cout, 1)    f32  VMEM accumulators across the P axis
    p = pl.program_id(1)

    @pl.when(p == 0)
    def _():
        sum_ref[...] = jnp.zeros_like(sum_ref)
        sq_ref[...] = jnp.zeros_like(sq_ref)

    # MXU bf16 matmul, f32 accumulate.  Lane dim = tP (dense).
    y = jnp.dot(w_ref[...], patches_ref[0],
                preferred_element_type=jnp.float32)          # (Cout, tP)
    y_ref[0] = y

    # One-pass stats: per-channel sum and sum-of-squares (lane-axis reduce).
    sum_ref[...] += jnp.sum(y, axis=1, keepdims=True)
    sq_ref[...] += jnp.sum(y * y, axis=1, keepdims=True)

    @pl.when(p == pl.num_programs(1) - 1)
    def _():
        mean = sum_ref[...] * inv_p
        var = jnp.maximum(sq_ref[...] * inv_p - mean * mean, 0.0)  # clamp cancellation
        mean_ref[0] = mean
        rstd_ref[0] = jax.lax.rsqrt(var + EPS)


def _norm_act_kernel(y_ref, mean_ref, rstd_ref, o_ref):
    # y_ref: (1, Cout, tP) f32; mean/rstd: (1, Cout, 1) f32; o_ref: (1, Cout, tP)
    y = (y_ref[0] - mean_ref[0]) * rstd_ref[0]
    o_ref[0] = jnp.where(y >= 0, y, NEG_SLOPE * y).astype(o_ref.dtype)


def _choose_ptile(P, K, Cout, budget_bytes=8 << 20):
    """Largest multiple-of-128 divisor of P whose double-buffered tiles fit the budget."""
    if P % 128 != 0:
        return P  # small case: full-extent last dim is always a legal block
    # Per lane: 2 buffers of bf16 patches (K*2 B) + 2 buffers of f32 y (Cout*4 B)
    per_lane = 2 * (K * 2) + 2 * (Cout * 4)
    max_t = max(128, budget_bytes // per_lane)
    best, t = 128, 128
    while t <= min(P, max_t):
        if P % t == 0:
            best = t
        t += 128
    return best


def downsampling_conv(x, weight, bias=None):
    """Conv3d(k=2, s=2) -> InstanceNorm3d(affine=False) -> LeakyReLU(0.01).

    x: (N, Cin, D, H, W); weight: (Cout, Cin, 2, 2, 2); bias: (Cout,) or None.
    `bias` is accepted for API parity but intentionally not applied: the
    InstanceNorm mean subtraction cancels any per-channel constant exactly.
    """
    N, Cin, D, H, W = x.shape
    Cout = weight.shape[0]
    D2, H2, W2 = D // 2, H // 2, W // 2
    # PyTorch Conv3d(k=2, s=2) silently drops trailing odd planes.
    x = x[:, :, :D2 * 2, :H2 * 2, :W2 * 2]
    P = D2 * H2 * W2
    K = Cin * 8

    # (N, Cin, D, H, W) -> (N, K, P); K ordered (Cin, kd, kh, kw) to match the
    # conv weight layout, P ordered (D2, H2, W2) so the kernel output
    # (N, Cout, P) reshapes straight to NCDHW (no output transpose pass).
    xp = x.reshape(N, Cin, D2, 2, H2, 2, W2, 2)
    xp = xp.transpose(0, 1, 3, 5, 7, 2, 4, 6)        # (N, Cin, 2, 2, 2, D2, H2, W2)
    patches = xp.reshape(N, K, P).astype(jnp.bfloat16)
    w_mat = weight.reshape(Cout, K).astype(jnp.bfloat16)

    tP = _choose_ptile(P, K, Cout)
    nP = P // tP
    vmem_limit = 32 * 1024 * 1024   # safe on v5e/v6e (128 MiB) and v7x (64 MiB)

    # Pass 1: conv matmul per P-tile + per-channel sum/sumsq accumulation.
    y_un, mean, rstd = pl.pallas_call(
        functools.partial(_conv_stats_kernel, inv_p=1.0 / P),
        out_shape=(
            jax.ShapeDtypeStruct((N, Cout, P), jnp.float32),
            jax.ShapeDtypeStruct((N, Cout, 1), jnp.float32),
            jax.ShapeDtypeStruct((N, Cout, 1), jnp.float32),
        ),
        grid_spec=pltpu.PrefetchScalarGridSpec(
            num_scalar_prefetch=0,
            grid=(N, nP),
            in_specs=[
                pl.BlockSpec((1, K, tP), lambda n, p: (n, 0, p)),
                pl.BlockSpec((Cout, K), lambda n, p: (0, 0)),
            ],
            out_specs=[
                pl.BlockSpec((1, Cout, tP), lambda n, p: (n, 0, p)),
                pl.BlockSpec((1, Cout, 1), lambda n, p: (n, 0, 0)),
                pl.BlockSpec((1, Cout, 1), lambda n, p: (n, 0, 0)),
            ],
            scratch_shapes=[
                pltpu.VMEM((Cout, 1), jnp.float32),
                pltpu.VMEM((Cout, 1), jnp.float32),
            ],
        ),
        compiler_params=pltpu.CompilerParams(
            dimension_semantics=("parallel", "arbitrary"),
            vmem_limit_bytes=vmem_limit,
        ),
    )(patches, w_mat)

    # Pass 2: normalize + LeakyReLU, lane-dense over P (both axes independent).
    out = pl.pallas_call(
        _norm_act_kernel,
        out_shape=jax.ShapeDtypeStruct((N, Cout, P), x.dtype),
        grid_spec=pltpu.PrefetchScalarGridSpec(
            num_scalar_prefetch=0,
            grid=(N, nP),
            in_specs=[
                pl.BlockSpec((1, Cout, tP), lambda n, p: (n, 0, p)),
                pl.BlockSpec((1, Cout, 1), lambda n, p: (n, 0, 0)),
                pl.BlockSpec((1, Cout, 1), lambda n, p: (n, 0, 0)),
            ],
            out_specs=pl.BlockSpec((1, Cout, tP), lambda n, p: (n, 0, p)),
        ),
        compiler_params=pltpu.CompilerParams(
            dimension_semantics=("parallel", "parallel"),
            vmem_limit_bytes=vmem_limit,
        ),
    )(y_un, mean, rstd)

    # (N, Cout, P) -> (N, Cout, D2, H2, W2): pure reshape, no transpose.
    return out.reshape(N, Cout, D2, H2, W2)


def _reference(x, weight, bias):
    # Pure-JAX f32 reference replicating the PyTorch module semantics.
    y = jax.lax.conv_general_dilated(
        x, weight, window_strides=(2, 2, 2), padding="VALID",
        dimension_numbers=("NCDHW", "OIDHW", "NCDHW"))
    y = y + bias.reshape(1, -1, 1, 1, 1)
    mean = jnp.mean(y, axis=(2, 3, 4), keepdims=True)
    var = jnp.mean((y - mean) ** 2, axis=(2, 3, 4), keepdims=True)
    y = (y - mean) * jax.lax.rsqrt(var + EPS)
    return jnp.where(y >= 0, y, NEG_SLOPE * y)


if __name__ == "__main__":
    key = jax.random.PRNGKey(0)
    kx, kw, kb = jax.random.split(key, 3)

    N, Cin, Cout, D, H, W = 2, 4, 8, 8, 8, 8
    x = jax.random.normal(kx, (N, Cin, D, H, W), dtype=jnp.float32)
    weight = jax.random.normal(kw, (Cout, Cin, 2, 2, 2), dtype=jnp.float32) * 0.1
    bias = jax.random.normal(kb, (Cout,), dtype=jnp.float32) * 0.1

    out = jax.block_until_ready(downsampling_conv(x, weight, bias))
    ref = jax.block_until_ready(_reference(x, weight, bias))

    assert out.shape == (N, Cout, D // 2, H // 2, W // 2)
    # bf16 patch/weight path vs f32 reference -> modest tolerance.
    assert jnp.allclose(out, ref, atol=3e-2, rtol=3e-2), float(
        jnp.max(jnp.abs(out - ref)))

    print("KERNEL_OK")
</pallas_src>

<mosaic_0001>
module attributes {stable_mosaic.version = 11 : i64} {
  func.func @_conv_stats_kernel(%arg0: i32, %arg1: i32, %arg2: memref<1x32x64xbf16, #tpu.memory_space<vmem>>, %arg3: memref<8x32xbf16, #tpu.memory_space<vmem>>, %arg4: memref<1x8x64xf32, #tpu.memory_space<vmem>>, %arg5: memref<1x8x1xf32, #tpu.memory_space<vmem>>, %arg6: memref<1x8x1xf32, #tpu.memory_space<vmem>>, %arg7: memref<8x1xf32, #tpu.memory_space<vmem>>, %arg8: memref<8x1xf32, #tpu.memory_space<vmem>>) attributes {dimension_semantics = [#tpu.dimension_semantics<parallel>, #tpu.dimension_semantics<arbitrary>], iteration_bounds = array<i64: 2, 1>, scalar_prefetch = 0 : i64, scratch_operands = 2 : i64, tpu.core_type = #tpu.core_type<tc>, window_params = [{transform_indices = @transform_0, window_bounds = array<i64: 1, 32, 64>}, {pipeline_mode = #tpu.pipeline_mode<synchronous>, transform_indices = @transform_1, window_bounds = array<i64: 8, 32>}, {transform_indices = @transform_2, window_bounds = array<i64: 1, 8, 64>}, {transform_indices = @transform_3, window_bounds = array<i64: 1, 8, 1>}, {transform_indices = @transform_4, window_bounds = array<i64: 1, 8, 1>}]} {
    %c0_i32 = arith.constant 0 : i32
    %0 = arith.cmpi eq, %arg1, %c0_i32 : i32
    %1 = arith.extui %0 : i1 to i32
    %c0_i32_0 = arith.constant 0 : i32
    %2 = arith.cmpi ne, %1, %c0_i32_0 : i32
    scf.if %2 {
      %cst_20 = arith.constant 0.000000e+00 : f32
      %24 = vector.broadcast %cst_20 : f32 to vector<8x1xf32>
      %c0_21 = arith.constant 0 : index
      %c0_22 = arith.constant 0 : index
      %25 = vector.load %arg7[%c0_21, %c0_22] : memref<8x1xf32, #tpu.memory_space<vmem>>, vector<8x1xf32>
      tpu.vector_store %arg7[%c0_21, %c0_22], %24 {strides = array<i32>} : memref<8x1xf32, #tpu.memory_space<vmem>>, vector<8x1xf32>,
      %cst_23 = arith.constant 0.000000e+00 : f32
      %26 = vector.broadcast %cst_23 : f32 to vector<8x1xf32>
      %c0_24 = arith.constant 0 : index
      %c0_25 = arith.constant 0 : index
      %27 = vector.load %arg8[%c0_24, %c0_25] : memref<8x1xf32, #tpu.memory_space<vmem>>, vector<8x1xf32>
      tpu.vector_store %arg8[%c0_24, %c0_25], %26 {strides = array<i32>} : memref<8x1xf32, #tpu.memory_space<vmem>>, vector<8x1xf32>,
    } else {
    }
    %c0 = arith.constant 0 : index
    %c0_1 = arith.constant 0 : index
    %3 = vector.load %arg3[%c0, %c0_1] : memref<8x32xbf16, #tpu.memory_space<vmem>>, vector<8x32xbf16>
    %c0_2 = arith.constant 0 : index
    %c0_3 = arith.constant 0 : index
    %c0_4 = arith.constant 0 : index
    %4 = vector.load %arg2[%c0_2, %c0_3, %c0_4] : memref<1x32x64xbf16, #tpu.memory_space<vmem>>, vector<1x32x64xbf16>
    %5 = vector.shape_cast %4 : vector<1x32x64xbf16> to vector<32x64xbf16>
    %cst = arith.constant dense<0.000000e+00> : vector<8x64xf32>
    %6 = tpu.matmul %3, %5, %cst {dimension_numbers = #tpu.dot_dimension_numbers<[1], [0], [0], [1], [0, 0, 1, 1], [], []>} : vector<8x32xbf16>, vector<32x64xbf16>, vector<8x64xf32> -> vector<8x64xf32>
    %c0_5 = arith.constant 0 : index
    %c0_6 = arith.constant 0 : index
    %c0_7 = arith.constant 0 : index
    %7 = vector.load %arg4[%c0_5, %c0_6, %c0_7] : memref<1x8x64xf32, #tpu.memory_space<vmem>>, vector<1x8x64xf32>
    %8 = vector.shape_cast %7 : vector<1x8x64xf32> to vector<8x64xf32>
    %9 = vector.shape_cast %6 : vector<8x64xf32> to vector<1x8x64xf32>
    tpu.vector_store %arg4[%c0_5, %c0_6, %c0_7], %9 {strides = array<i32>} : memref<1x8x64xf32, #tpu.memory_space<vmem>>, vector<1x8x64xf32>,
    %c0_8 = arith.constant 0 : index
    %c0_9 = arith.constant 0 : index
    %10 = vector.load %arg7[%c0_8, %c0_9] : memref<8x1xf32, #tpu.memory_space<vmem>>, vector<8x1xf32>
    %cst_10 = arith.constant dense<0.000000e+00> : vector<8xf32>
    %11 = vector.multi_reduction <add>, %6, %cst_10 [1] : vector<8x64xf32> to vector<8xf32>
    %12 = vector.shape_cast %11 : vector<8xf32> to vector<8x1xf32>
    %13 = arith.addf %10, %12 : vector<8x1xf32>
    %c0_11 = arith.constant 0 : index
    %c0_12 = arith.constant 0 : index
    %14 = vector.load %arg7[%c0_11, %c0_12] : memref<8x1xf32, #tpu.memory_space<vmem>>, vector<8x1xf32>
    tpu.vector_store %arg7[%c0_11, %c0_12], %13 {strides = array<i32>} : memref<8x1xf32, #tpu.memory_space<vmem>>, vector<8x1xf32>,
    %c0_13 = arith.constant 0 : index
    %c0_14 = arith.constant 0 : index
    %15 = vector.load %arg8[%c0_13, %c0_14] : memref<8x1xf32, #tpu.memory_space<vmem>>, vector<8x1xf32>
    %16 = arith.mulf %6, %6 : vector<8x64xf32>
    %cst_15 = arith.constant dense<0.000000e+00> : vector<8xf32>
    %17 = vector.multi_reduction <add>, %16, %cst_15 [1] : vector<8x64xf32> to vector<8xf32>
    %18 = vector.shape_cast %17 : vector<8xf32> to vector<8x1xf32>
    %19 = arith.addf %15, %18 : vector<8x1xf32>
    %c0_16 = arith.constant 0 : index
    %c0_17 = arith.constant 0 : index
    %20 = vector.load %arg8[%c0_16, %c0_17] : memref<8x1xf32, #tpu.memory_space<vmem>>, vector<8x1xf32>
    tpu.vector_store %arg8[%c0_16, %c0_17], %19 {strides = array<i32>} : memref<8x1xf32, #tpu.memory_space<vmem>>, vector<8x1xf32>,
    %c0_i32_18 = arith.constant 0 : i32
    %21 = arith.cmpi eq, %arg1, %c0_i32_18 : i32
    %22 = arith.extui %21 : i1 to i32
    %c0_i32_19 = arith.constant 0 : i32
    %23 = arith.cmpi ne, %22, %c0_i32_19 : i32
    scf.if %23 {
      %c0_20 = arith.constant 0 : index
      %c0_21 = arith.constant 0 : index
      %24 = vector.load %arg7[%c0_20, %c0_21] : memref<8x1xf32, #tpu.memory_space<vmem>>, vector<8x1xf32>
      %cst_22 = arith.constant 1.562500e-02 : f32
      %25 = vector.broadcast %cst_22 : f32 to vector<8x1xf32>
      %26 = arith.mulf %24, %25 : vector<8x1xf32>
      %c0_23 = arith.constant 0 : index
      %c0_24 = arith.constant 0 : index
      %27 = vector.load %arg8[%c0_23, %c0_24] : memref<8x1xf32, #tpu.memory_space<vmem>>, vector<8x1xf32>
      %cst_25 = arith.constant 1.562500e-02 : f32
      %28 = vector.broadcast %cst_25 : f32 to vector<8x1xf32>
      %29 = arith.mulf %27, %28 : vector<8x1xf32>
      %30 = arith.mulf %26, %26 : vector<8x1xf32>
      %31 = arith.subf %29, %30 : vector<8x1xf32>
      %cst_26 = arith.constant 0.000000e+00 : f32
      %32 = vector.broadcast %cst_26 : f32 to vector<8x1xf32>
      %33 = arith.maximumf %31, %32 : vector<8x1xf32>
      %c0_27 = arith.constant 0 : index
      %c0_28 = arith.constant 0 : index
      %c0_29 = arith.constant 0 : index
      %34 = vector.load %arg5[%c0_27, %c0_28, %c0_29] : memref<1x8x1xf32, #tpu.memory_space<vmem>>, vector<1x8x1xf32>
      %35 = vector.shape_cast %34 : vector<1x8x1xf32> to vector<8x1xf32>
      %36 = vector.shape_cast %26 : vector<8x1xf32> to vector<1x8x1xf32>
      tpu.vector_store %arg5[%c0_27, %c0_28, %c0_29], %36 {strides = array<i32>} : memref<1x8x1xf32, #tpu.memory_space<vmem>>, vector<1x8x1xf32>,
      %cst_30 = arith.constant 9.99999974E-6 : f32
      %37 = vector.broadcast %cst_30 : f32 to vector<8x1xf32>
      %38 = arith.addf %33, %37 : vector<8x1xf32>
      %39 = math.rsqrt %38 : vector<8x1xf32>
      %c0_31 = arith.constant 0 : index
      %c0_32 = arith.constant 0 : index
      %c0_33 = arith.constant 0 : index
      %40 = vector.load %arg6[%c0_31, %c0_32, %c0_33] : memref<1x8x1xf32, #tpu.memory_space<vmem>>, vector<1x8x1xf32>
      %41 = vector.shape_cast %40 : vector<1x8x1xf32> to vector<8x1xf32>
      %42 = vector.shape_cast %39 : vector<8x1xf32> to vector<1x8x1xf32>
      tpu.vector_store %arg6[%c0_31, %c0_32, %c0_33], %42 {strides = array<i32>} : memref<1x8x1xf32, #tpu.memory_space<vmem>>, vector<1x8x1xf32>,
    } else {
    }
    return
  }
  func.func @transform_0(%arg0: i32, %arg1: i32) -> (i32, i32, i32) {
    %c0_i32 = arith.constant 0 : i32
    %c0_i32_0 = arith.constant 0 : i32
    return %arg0, %c0_i32, %arg1 : i32, i32, i32
  }
  func.func @transform_1(%arg0: i32, %arg1: i32) -> (i32, i32) {
    %c0_i32 = arith.constant 0 : i32
    %c0_i32_0 = arith.constant 0 : i32
    %c0_i32_1 = arith.constant 0 : i32
    return %c0_i32, %c0_i32_0 : i32, i32
  }
  func.func @transform_2(%arg0: i32, %arg1: i32) -> (i32, i32, i32) {
    %c0_i32 = arith.constant 0 : i32
    %c0_i32_0 = arith.constant 0 : i32
    return %arg0, %c0_i32, %arg1 : i32, i32, i32
  }
  func.func @transform_3(%arg0: i32, %arg1: i32) -> (i32, i32, i32) {
    %c0_i32 = arith.constant 0 : i32
    %c0_i32_0 = arith.constant 0 : i32
    %c0_i32_1 = arith.constant 0 : i32
    return %arg0, %c0_i32, %c0_i32_0 : i32, i32, i32
  }
  func.func @transform_4(%arg0: i32, %arg1: i32) -> (i32, i32, i32) {
    %c0_i32 = arith.constant 0 : i32
    %c0_i32_0 = arith.constant 0 : i32
    %c0_i32_1 = arith.constant 0 : i32
    return %arg0, %c0_i32, %c0_i32_0 : i32, i32, i32
  }
}

</mosaic_0001>

<llo_original>
// kernel: tpu_custom_call.1
$region0: #{tpu_custom_call.1}
  #allocation0 [shape = 'u32[]', space=smem, size = 0x4, offset = 0x4, fixed_abs, tag = 'smem constant byte address 0x4 - core index']
  #allocation1 [shape = 'u32[72,128]{1,0:T(1,128)}', space=vmem, size = 0x9000, scoped, tag = 'internal scratch']
  #allocation2 [shape = 'f32[8,1]{1,0:T(8,128)}', space=vmem, size = 0x1000, scoped, tag = 'scratch operand']
  #allocation3 [shape = 'f32[8,1]{1,0:T(8,128)}', space=vmem, size = 0x1000, scoped, tag = 'scratch operand']
  %s0 = inlined_call_operand.hbm [shape: bf16[2,32,64], index: 0, kind: input, shape index: {}]
  %s1 = inlined_call_operand.hbm [shape: bf16[8,32], index: 1, kind: input, shape index: {}]
  %s2 = inlined_call_operand.hbm [shape: f32[2,8,64], index: 2, kind: output, shape index: {0}]
  %s3 = inlined_call_operand.vmem [shape: f32[2,8,1], index: 3, kind: output, shape index: {1}]
  %s4 = inlined_call_operand.vmem [shape: f32[2,8,1], index: 4, kind: output, shape index: {2}]
  %5 = xla_tuple %s2, %s3, %s4
  %s6 = sld [smem:[#allocation0]]
  $region73: #{tpu_custom_call.1} parent=0
    _
  %s8 = ssub.s32 1, %s6
  %s9 = scalar_select 0, %s8, %s6
  $region1: #{tpu_custom_call.1} parent=0
    #allocation4 [shape = 'u8[16384]{0}', space=vmem, size = 0x4000, scoped, tag = 'input window, operand 0']
    #allocation5 [shape = 's32[2]{0}', space=sflag, size = 0x8, scoped, tag = 'scoped memory for tpu_custom_call.1']
    #allocation6 [shape = 's32[2]{0}', space=sflag, size = 0x8, scoped, tag = 'scoped memory for tpu_custom_call.1']
    #allocation7 [shape = 'u8[2048]{0}', space=vmem, size = 0x800, scoped, tag = 'input window, operand 1, single buffered']
    #allocation8 [shape = 's32[1]{0}', space=sflag, size = 0x4, scoped, tag = 'scoped memory for tpu_custom_call.1']
    #allocation9 [shape = 'u8[8192]{0}', space=vmem, size = 0x2000, scoped, tag = 'output window, operand 0']
    %10 = vsyncpa [#allocation5], 0
    %s11 = scalar_lea.sflag [#allocation5], 1
    %12 = vsyncpa %s11, 0
    %13 = vsyncpa [#allocation8], 0
    %14 = vsyncpa [#allocation6], 0
    %s15 = scalar_lea.sflag [#allocation6], 1
    %16 = vsyncpa %s15, 0
    loop: start=0, step=1, limit=4
    $region2: #{tpu_custom_call.1} parent=1 // loop_pre_header
      _
    $region3: #{tpu_custom_call.1} parent=1 // loop_header
      %s18 = sphi 0, %s22
      %p19 = scmp.ge.s32.totalorder %s18, 4
      %s25 = sphi 0, %s37
      %s26 = sphi 0, %s33
      %s27 = sphi 0, %s25
      %s28 = sphi 0, %s26
      %s29 = sphi 0, %s27
      %s30 = sphi 0, %s28
      %s42 = sphi 0, %s44
      %s45 = sphi 0, %s42
      %s46 = sphi 0, %s45
      %s62 = sphi 0, %s46
      %s66 = sphi 0, %s66
      %s68 = sphi 0, %s66
      %s69 = sphi 0, %s68
      %s83 = sphi 0, %s69
      %s91 = sphi 0, %s93
      %s94 = sphi 0, %s91
      %s95 = sphi 0, %s94
      %s111 = sphi 0, %s95
      %s117 = sphi 0, %s119
      %s120 = sphi 0, %s117
      %s121 = sphi 0, %s120
      %s137 = sphi 0, %s121
      %s143 = sphi 0, %s145
      %s146 = sphi 0, %s143
      %s147 = sphi 0, %s146
      %s163 = sphi 0, %s147
    $region4: #{tpu_custom_call.1} parent=1 // loop_header_branch
      %21 = sbr.rel (%p19) target = $region8
    $region5: #{tpu_custom_call.1} parent=1 // loop_body
      %s23 = ssub.s32 %s18, 1
      %s24 = ssub.s32 %s18, 2
      %s31 = sadd.s32 1, %s26
      %p32 = scmp.ge.s32.totalorder %s31, 1
      %s33 = scalar_select %p32, 0, %s31
      %s34 = sadd.s32 1, %s25
      %s35 = scalar_select %p32, %s34, %s25
      %p36 = scmp.ge.s32.totalorder %s35, 2
      %s37 = scalar_select %p36, 0, %s35
      %s38 = ssub.s32 %s25, %s37
      %s39 = ssub.s32 %s26, %s33
      %s40 = sor.u32 %s38, %s39
      %p41 = scmp.eq.s32.totalorder %s40, 0
      %s43 = sadd.s32 %s42, 1
      %s44 = scalar_select %p41, %s42, %s43
      %p47 = pneg %p41
      %p48 = scmp.eq.s32.totalorder %s18, 1
      %p49 = por %p47, %p48
      %p50 = scmp.ne.s32.totalorder %s42, %s45
      %p51 = scmp.eq.s32.totalorder %s18, 0
      %p52 = por %p50, %p51
      %p53 = scmp.ne.s32.totalorder %s42, %s45
      %p54 = scmp.eq.s32.totalorder %s23, 1
      %p55 = por %p53, %p54
      %p56 = scmp.ne.s32.totalorder %s45, %s46
      %p57 = scmp.eq.s32.totalorder %s23, 0
      %p58 = por %p56, %p57
      %p59 = scmp.ne.s32.totalorder %s45, %s46
      %p60 = scmp.eq.s32.totalorder %s24, 1
      %p61 = por %p59, %p60
      %p63 = scmp.ne.s32.totalorder %s46, %s62
      %p64 = scmp.eq.s32.totalorder %s24, 0
      %p65 = por %p63, %p64
      %s67 = sadd.s32 %s66, 1
      %p70 = scmp.eq.s32.totalorder %s18, 1
      %p71 = scmp.ne.s32.totalorder %s66, %s68
      %p72 = scmp.eq.s32.totalorder %s18, 0
      %p73 = por %p71, %p72
      %p74 = scmp.ne.s32.totalorder %s66, %s68
      %p75 = scmp.eq.s32.totalorder %s23, 1
      %p76 = por %p74, %p75
      %p77 = scmp.ne.s32.totalorder %s68, %s69
      %p78 = scmp.eq.s32.totalorder %s23, 0
      %p79 = por %p77, %p78
      %p80 = scmp.ne.s32.totalorder %s68, %s69
      %p81 = scmp.eq.s32.totalorder %s24, 1
      %p82 = por %p80, %p81
      %p84 = scmp.ne.s32.totalorder %s69, %s83
      %p85 = scmp.eq.s32.totalorder %s24, 0
      %p86 = por %p84, %p85
      %s87 = ssub.s32 %s25, %s37
      %s88 = ssub.s32 %s26, %s33
      %s89 = sor.u32 %s87, %s88
      %p90 = scmp.eq.s32.totalorder %s89, 0
      %s92 = sadd.s32 %s91, 1
      %s93 = scalar_select %p90, %s91, %s92
      %p96 = pneg %p90
      %p97 = scmp.eq.s32.totalorder %s18, 1
      %p98 = por %p96, %p97
      %p99 = scmp.ne.s32.totalorder %s91, %s94
      %p100 = scmp.eq.s32.totalorder %s18, 0
      %p101 = por %p99, %p100
      %p102 = scmp.ne.s32.totalorder %s91, %s94
      %p103 = scmp.eq.s32.totalorder %s23, 1
      %p104 = por %p102, %p103
      %p105 = scmp.ne.s32.totalorder %s94, %s95
      %p106 = scmp.eq.s32.totalorder %s23, 0
      %p107 = por %p105, %p106
      %p108 = scmp.ne.s32.totalorder %s94, %s95
      %p109 = scmp.eq.s32.totalorder %s24, 1
      %p110 = por %p108, %p109
      %p112 = scmp.ne.s32.totalorder %s95, %s111
      %p113 = scmp.eq.s32.totalorder %s24, 0
      %p114 = por %p112, %p113
      %s115 = ssub.s32 %s25, %s37
      %p116 = scmp.eq.s32.totalorder %s115, 0
      %s118 = sadd.s32 %s117, 1
      %s119 = scalar_select %p116, %s117, %s118
      %p122 = pneg %p116
      %p123 = scmp.eq.s32.totalorder %s18, 1
      %p124 = por %p122, %p123
      %p125 = scmp.ne.s32.totalorder %s117, %s120
      %p126 = scmp.eq.s32.totalorder %s18, 0
      %p127 = por %p125, %p126
      %p128 = scmp.ne.s32.totalorder %s117, %s120
      %p129 = scmp.eq.s32.totalorder %s23, 1
      %p130 = por %p128, %p129
      %p131 = scmp.ne.s32.totalorder %s120, %s121
      %p132 = scmp.eq.s32.totalorder %s23, 0
      %p133 = por %p131, %p132
      %p134 = scmp.ne.s32.totalorder %s120, %s121
      %p135 = scmp.eq.s32.totalorder %s24, 1
      %p136 = por %p134, %p135
      %p138 = scmp.ne.s32.totalorder %s121, %s137
      %p139 = scmp.eq.s32.totalorder %s24, 0
      %p140 = por %p138, %p139
      %s141 = ssub.s32 %s25, %s37
      %p142 = scmp.eq.s32.totalorder %s141, 0
      %s144 = sadd.s32 %s143, 1
      %s145 = scalar_select %p142, %s143, %s144
      %p148 = pneg %p142
      %p149 = scmp.eq.s32.totalorder %s18, 1
      %p150 = por %p148, %p149
      %p151 = scmp.ne.s32.totalorder %s143, %s146
      %p152 = scmp.eq.s32.totalorder %s18, 0
      %p153 = por %p151, %p152
      %p154 = scmp.ne.s32.totalorder %s143, %s146
      %p155 = scmp.eq.s32.totalorder %s23, 1
      %p156 = por %p154, %p155
      %p157 = scmp.ne.s32.totalorder %s146, %s147
      %p158 = scmp.eq.s32.totalorder %s23, 0
      %p159 = por %p157, %p158
      %p160 = scmp.ne.s32.totalorder %s146, %s147
      %p161 = scmp.eq.s32.totalorder %s24, 1
      %p162 = por %p160, %p161
      %p164 = scmp.ne.s32.totalorder %s147, %s163
      %p165 = scmp.eq.s32.totalorder %s24, 0
      %p166 = por %p164, %p165
      %p167 = scmp.le.s32.totalorder 1, %s18
      %p168 = scmp.lt.s32.totalorder %s18, 3
      %p169 = pnand %p167, %p168
      %p170 = pneg %p169
      // Predicated region
      $region9: #{tpu_custom_call.1} parent=5 // pred_check
        _
      $region10: #{tpu_custom_call.1} parent=5 // pred_check_branch
        %172 = sbr.rel (%p169) target = $region12
      $region11: #{tpu_custom_call.1} parent=5 // pred_region
        %s173 = ssub.s32 %s18, 1
        // Predicated region
        $region13: #{tpu_custom_call.1} parent=11 // pred_check
          %p174 = pneg %p79
        $region14: #{tpu_custom_call.1} parent=11 // pred_check_branch
          %176 = sbr.rel (%p174) target = $region16
        $region15: #{tpu_custom_call.1} parent=11 // pred_region
          %178 = vsyncadd [#allocation8], 0
          %s180 = sshll.u32 %s1, 4
          %s181 = int_to_ptr.hbm [resolvable:$true] %s180
          %s182 = sshll.u32 [#allocation7], 4
          %s183 = int_to_ptr.vmem [resolvable:$true] %s182
          %185 = dma.hbm_to_vmem [thread:$0]  %s181, 64, %s183, [#allocation8]
        $region16: #{tpu_custom_call.1} parent=11 // pred_fallthru
          _
      $region12: #{tpu_custom_call.1} parent=5 // pred_fallthru
        _
      %p186 = scmp.lt.s32.totalorder %s18, 2
      // Predicated region
      $region17: #{tpu_custom_call.1} parent=5 // pred_check
        %p187 = pneg %p186
      $region18: #{tpu_custom_call.1} parent=5 // pred_check_branch
        %189 = sbr.rel (%p187) target = $region20
      $region19: #{tpu_custom_call.1} parent=5 // pred_region
        // Predicated region
        $region21: #{tpu_custom_call.1} parent=19 // pred_check
          %p190 = pneg %p52
        $region22: #{tpu_custom_call.1} parent=19 // pred_check_branch
          %192 = sbr.rel (%p190) target = $region24
        $region23: #{tpu_custom_call.1} parent=19 // pred_region
          %s193 = sand.u32 %s42, 1
          %s194 = scalar_lea.sflag [#allocation5], %s193
          %s195 = sand.u32 %s42, 1
          %s196 = smul.addr %s195, 16
          %s197 = scalar_lea.vmem [#allocation4], %s196
          %199 = vsyncadd %s194, 0
          %s200 = smul.addr %s25, 4
          %s201 = sadd.s32 %s26, %s200
          %s202 = smul.addr %s201, 4
          %s203 = scalar_lea.hbm %s0, %s202
          %s204 = sshll.u32 %s203, 4
          %s205 = int_to_ptr.hbm [resolvable:$true] %s204
          %s206 = sshll.u32 %s197, 4
          %s207 = int_to_ptr.vmem [resolvable:$true] %s206
          %212 = dma.hbm_to_vmem [thread:$0]  %s205, 256, %s207, %s194, 64, 64, 4
        $region24: #{tpu_custom_call.1} parent=19 // pred_fallthru
          _
      $region20: #{tpu_custom_call.1} parent=5 // pred_fallthru
        _
      %p213 = scmp.le.s32.totalorder 1, %s18
      %p214 = scmp.lt.s32.totalorder %s18, 3
      %p215 = pnand %p213, %p214
      %p216 = pneg %p215
      // Predicated region
      $region25: #{tpu_custom_call.1} parent=5 // pred_check
        _
      $region26: #{tpu_custom_call.1} parent=5 // pred_check_branch
        %218 = sbr.rel (%p215) target = $region28
      $region27: #{tpu_custom_call.1} parent=5 // pred_region
        %s219 = ssub.s32 %s18, 1
        %s220 = sand.u32 %s45, 1
        %s221 = scalar_lea.sflag [#allocation5], %s220
        %s222 = sand.u32 %s45, 1
        %s223 = smul.addr %s222, 16
        %s224 = scalar_lea.vmem [#allocation4], %s223
        // Predicated region
        $region29: #{tpu_custom_call.1} parent=27 // pred_check
          %p225 = pneg %p58
        $region30: #{tpu_custom_call.1} parent=27 // pred_check_branch
          %227 = sbr.rel (%p225) target = $region32
        $region31: #{tpu_custom_call.1} parent=27 // pred_region
          %229 = dma.done %s221, 256
        $region32: #{tpu_custom_call.1} parent=27 // pred_fallthru
          _
        // Predicated region
        $region33: #{tpu_custom_call.1} parent=27 // pred_check
          %p230 = pneg %p79
        $region34: #{tpu_custom_call.1} parent=27 // pred_check_branch
          %232 = sbr.rel (%p230) target = $region36
        $region35: #{tpu_custom_call.1} parent=27 // pred_region
          %234 = dma.done [#allocation8], 64
        $region36: #{tpu_custom_call.1} parent=27 // pred_fallthru
          _
        %s235 = sand.u32 %s45, 1
        %s236 = scalar_lea.sflag [#allocation5], %s235
        %s237 = sand.u32 %s45, 1
        %s238 = smul.addr %s237, 16
        %s239 = scalar_lea.vmem [#allocation4], %s238
        %p240 = pneg %p58
        %p241 = pneg %p55
        %p242 = pneg %p79
        %p243 = pneg %p76
        %p244 = pneg %p107
        %p245 = pneg %p104
        %s246 = sand.u32 %s94, 1
        %s247 = scalar_lea.sflag [#allocation6], %s246
        %s248 = sand.u32 %s94, 1
        %s249 = smul.addr %s248, 8
        %s250 = scalar_lea.vmem [#allocation9], %s249
        %p251 = pneg %p133
        %p252 = pneg %p130
        %p253 = scmp.lt.s32.totalorder %s27, 1
        %s254 = scalar_select %p253, %s27, 1
        %s255 = smul.addr %s254, 8
        %s256 = scalar_lea.vmem %s3, %s255
        %p257 = pneg %p159
        %p258 = pneg %p156
        %p259 = scmp.lt.s32.totalorder %s27, 1
        %s260 = scalar_select %p259, %s27, 1
        %s261 = smul.addr %s260, 8
        %s262 = scalar_lea.vmem %s4, %s261
        %p263 = scmp.lt.s32.totalorder %s27, 1
        %s264 = scalar_select %p263, %s27, 1
        %s265 = smul.addr %s264, 8
        %s266 = scalar_lea.vmem %s3, %s265
        %p267 = scmp.lt.s32.totalorder %s27, 1
        %s268 = scalar_select %p267, %s27, 1
        %s269 = smul.addr %s268, 8
        %s270 = scalar_lea.vmem %s4, %s269
        %p272 = scmp.eq.s32.totalorder %s28, 0
        // Predicated region
        $region37: #{tpu_custom_call.1} parent=27 // pred_check
          %p273 = pneg %p272
        $region38: #{tpu_custom_call.1} parent=27 // pred_check_branch
          %275 = sbr.rel (%p273) target = $region40
        $region39: #{tpu_custom_call.1} parent=27 // pred_region
          %vm276 = vcmask 7168
          %277 = vst.msk [vmem:[#allocation2] sm:$0xff] %vm276, 0.0
          %278 = vst.msk [vmem:[#allocation3] sm:$0xff] %vm276, 0.0
        $region40: #{tpu_custom_call.1} parent=27 // pred_fallthru
          _
        %v279 = vld [vmem:[#allocation7] sm:$0xf]
        %v280 = vld [vmem:[%s224] sm:$0xf]
        %v281 = vld [vmem:[%s224 + $0x4] sm:$0xf]
        %v282 = vld [vmem:[%s224 + $0x8] sm:$0xf]
        %v283 = vld [vmem:[%s224 + $0xc] sm:$0xf]
        %v288 = vunpack.c.l.b16 %v280
        %v289 = vunpack.c.l.b16 %v281
        %v290 = vunpack.c.l.b16 %v282
        %v291 = vunpack.c.l.b16 %v283
        %v292 = vpack.c.b16 %v289, %v288
        %v293 = vpack.c.b16 %v291, %v290
        %vm296 = vcmask 261120
        %v298 = vsel %vm296, %v279, 0
        %300 = vmatpush.bf16.msra.mxu0 0
        %301 = vmatpush.bf16.msra.mxu0 0
        %302 = vmatpush.bf16.msra.mxu0 0
        %303 = vmatpush.bf16.msra.mxu0 0
        %304 = vmatpush.bf16.msra.mxu0 0
        %305 = vmatpush.bf16.msra.mxu0 0
        %306 = vmatpush.bf16.msra.mxu0 %v293
        %307 = vmatpush.bf16.msra.mxu0 %v292
        %308 = vmatmul.bf16.gmra.mxu0 %v298
        %v309 = vpop.f32.mrf.mxu0
        %v310 = vadd.f32 0.0, %v309
        %v311 = vpop.f32.mrf.mxu0
        %312 = vdwg.mxu0
        %vm313 = vcmask 523264
        %314 = vst.msk [vmem:[%s250] sm:$0xff] %vm313, %v310
        %v315 = vld [vmem:[#allocation2] sm:$0xff]
        %v316 = vsel %vm313, %v310, 0.0
        %317 = vadd.xlane.f32.xlu0 %v316
        %v318 = vpop.xlane.xlu0 %317
        %v319 = vadd.f32 %v315, %v318
        %vm320 = vcmask 7168
        %321 = vst.msk [vmem:[#allocation2] sm:$0xff] %vm320, %v319
        %v322 = vld [vmem:[#allocation3] sm:$0xff]
        %v323 = vmul.f32 %v310, %v310
        %v324 = vsel %vm313, %v323, 0.0
        %325 = vadd.xlane.f32.xlu0 %v324
        %v326 = vpop.xlane.xlu0 %325
        %v327 = vadd.f32 %v322, %v326
        %328 = vst.msk [vmem:[#allocation3] sm:$0xff] %vm320, %v327
        // Predicated region
        $region41: #{tpu_custom_call.1} parent=27 // pred_check
          %p329 = pneg %p272
        $region42: #{tpu_custom_call.1} parent=27 // pred_check_branch
          %331 = sbr.rel (%p329) target = $region44
        $region43: #{tpu_custom_call.1} parent=27 // pred_region
          %v332 = vld [vmem:[#allocation2] sm:$0xff]
          %v333 = vmul.f32 %v332, 0.015625
          %v334 = vld [vmem:[#allocation3] sm:$0xff]
          %v335 = vmul.f32 %v334, 0.015625
          %v336 = vmul.f32 %v333, %v333
          %v337 = vsub.f32 %v335, %v336
          %v338 = vmax.f32 %v337, 0.0
          %339 = vst.msk [vmem:[%s266] sm:$0xff] %vm320, %v333
          %v340 = vadd.f32 %v338, 1e-05
          %v341 = vrsqrt.pop %v340
          %v342 = vmul.f32 %v341, %v340
          %v343 = vmul.f32 %v342, %v341
          %v344 = vmul.f32 0.5, %v343
          %v345 = vsub.f32 1.5, %v344
          %v346 = vmul.f32 %v341, %v345
          %vm347 = vweird.f32 %v340
          %vm348 = vweird.f32 %v341
          %vm349 = vmor %vm347, %vm348
          %v350 = vsel %vm349, %v341, %v346
          %351 = vst.msk [vmem:[%s270] sm:$0xff] %vm320, %v350
        $region44: #{tpu_custom_call.1} parent=27 // pred_fallthru
          _
        %s352 = sand.u32 %s94, 1
        %s353 = scalar_lea.sflag [#allocation6], %s352
        %s354 = sand.u32 %s94, 1
        %s355 = smul.addr %s354, 8
        %s356 = scalar_lea.vmem [#allocation9], %s355
        %p357 = scmp.lt.s32.totalorder %s27, 1
        %s358 = scalar_select %p357, %s27, 1
        %s359 = smul.addr %s358, 8
        %s360 = scalar_lea.vmem %s3, %s359
        %p361 = scmp.lt.s32.totalorder %s27, 1
        %s362 = scalar_select %p361, %s27, 1
        %s363 = smul.addr %s362, 8
        %s364 = scalar_lea.vmem %s4, %s363
        // Predicated region
        $region45: #{tpu_custom_call.1} parent=27 // pred_check
          %p365 = pneg %p104
        $region46: #{tpu_custom_call.1} parent=27 // pred_check_branch
          %367 = sbr.rel (%p365) target = $region48
        $region47: #{tpu_custom_call.1} parent=27 // pred_region
          %369 = vsyncadd %s353, 0
          %s370 = sadd.s32 %s28, %s27
          %s371 = smul.addr %s370, 8
          %s372 = scalar_lea.hbm %s2, %s371
          %s374 = sshll.u32 %s356, 4
          %s375 = int_to_ptr.vmem [resolvable:$true] %s374
          %s376 = sshll.u32 %s372, 4
          %s377 = int_to_ptr.hbm [resolvable:$true] %s376
          %379 = dma.vmem_to_hbm [thread:$0]  %s375, 128, %s377, %s353
        $region48: #{tpu_custom_call.1} parent=27 // pred_fallthru
          _
        // Predicated region
        $region49: #{tpu_custom_call.1} parent=27 // pred_check
          %p380 = pneg %p130
        $region50: #{tpu_custom_call.1} parent=27 // pred_check_branch
          %382 = sbr.rel (%p380) target = $region52
        $region51: #{tpu_custom_call.1} parent=27 // pred_region
          _
        $region52: #{tpu_custom_call.1} parent=27 // pred_fallthru
          _
        // Predicated region
        $region53: #{tpu_custom_call.1} parent=27 // pred_check
          %p383 = pneg %p156
        $region54: #{tpu_custom_call.1} parent=27 // pred_check_branch
          %385 = sbr.rel (%p383) target = $region56
        $region55: #{tpu_custom_call.1} parent=27 // pred_region
          _
        $region56: #{tpu_custom_call.1} parent=27 // pred_fallthru
          _
      $region28: #{tpu_custom_call.1} parent=5 // pred_fallthru
        _
      %p386 = scmp.le.s32.totalorder 2, %s18
      // Predicated region
      $region57: #{tpu_custom_call.1} parent=5 // pred_check
        %p387 = pneg %p386
      $region58: #{tpu_custom_call.1} parent=5 // pred_check_branch
        %389 = sbr.rel (%p387) target = $region60
      $region59: #{tpu_custom_call.1} parent=5 // pred_region
        %s390 = ssub.s32 %s18, 2
        // Predicated region
        $region61: #{tpu_custom_call.1} parent=59 // pred_check
          %p391 = pneg %p110
        $region62: #{tpu_custom_call.1} parent=59 // pred_check_branch
          %393 = sbr.rel (%p391) target = $region64
        $region63: #{tpu_custom_call.1} parent=59 // pred_region
          %s394 = sand.u32 %s95, 1
          %s395 = scalar_lea.sflag [#allocation6], %s394
          %s396 = sand.u32 %s95, 1
          %s397 = smul.addr %s396, 8
          %s398 = scalar_lea.vmem [#allocation9], %s397
          %400 = dma.done %s395, 128
        $region64: #{tpu_custom_call.1} parent=59 // pred_fallthru
          _
        // Predicated region
        $region65: #{tpu_custom_call.1} parent=59 // pred_check
          %p401 = pneg %p136
        $region66: #{tpu_custom_call.1} parent=59 // pred_check_branch
          %403 = sbr.rel (%p401) target = $region68
        $region67: #{tpu_custom_call.1} parent=59 // pred_region
          %p404 = scmp.lt.s32.totalorder %s29, 1
          %s405 = scalar_select %p404, %s29, 1
          %s406 = smul.addr %s405, 8
          %s407 = scalar_lea.vmem %s3, %s406
        $region68: #{tpu_custom_call.1} parent=59 // pred_fallthru
          _
        // Predicated region
        $region69: #{tpu_custom_call.1} parent=59 // pred_check
          %p408 = pneg %p162
        $region70: #{tpu_custom_call.1} parent=59 // pred_check_branch
          %410 = sbr.rel (%p408) target = $region72
        $region71: #{tpu_custom_call.1} parent=59 // pred_region
          %p411 = scmp.lt.s32.totalorder %s29, 1
          %s412 = scalar_select %p411, %s29, 1
          %s413 = smul.addr %s412, 8
          %s414 = scalar_lea.vmem %s4, %s413
        $region72: #{tpu_custom_call.1} parent=59 // pred_fallthru
          _
      $region60: #{tpu_custom_call.1} parent=5 // pred_fallthru
        _
    $region6: #{tpu_custom_call.1} parent=1 // loop_footer
      %s22 = sadd.s32 1, %s18
    $region7: #{tpu_custom_call.1} parent=1 // loop_footer_branch
      %17 = sbr.rel target = $region3
    $region8: #{tpu_custom_call.1} parent=1 // loop_exit
      _
    %415 = vsyncpa [#allocation5], 1
    %s416 = scalar_lea.sflag [#allocation5], 1
    %417 = vsyncpa %s416, 1
    %418 = vsyncpa [#allocation8], 1
    %419 = vsyncpa [#allocation6], 1
    %s420 = scalar_lea.sflag [#allocation6], 1
    %421 = vsyncpa %s420, 1

</llo_original>
